<compile_context>
chip_gen: v7x
topology: tpu7x:2x2x1
jax: 0.10.0
libtpu: 0.0.40
codegen_flags: <defaults>
</compile_context>

<pallas_src>
import functools

import jax
import jax.numpy as jnp
from jax import lax
from jax.experimental import pallas as pl
from jax.experimental.pallas import tpu as pltpu

_TEMPERATURE = 2.0
_EPS = 1e-6
_LANE = 128


def _kd_partial_kernel(gt_ref, src_ref, tgt_ref, s_ref, t_ref, cnt_ref, *,
                       chunk, unroll, v_total, tiles_per_shard):
    """Accumulate class-conditional logit sums / counts for one (sample, V-shard).

    gt_ref : (1, TV)   int8/int32  labels
    src_ref: (C, TV)   f32/bf16    source logits
    tgt_ref: (C, TV)   f32/bf16    target logits
    s_ref  : (NC, C)   f32         sum_{v: gt==i} src[:, v]   (resident over tile axis)
    t_ref  : (NC, C)   f32         sum_{v: gt==i} tgt[:, v]
    cnt_ref: (NC, 1)   f32         #{v: gt==i}
    """
    nc = s_ref.shape[0]
    tv = src_ref.shape[-1]
    n_chunks = tv // chunk
    n_outer = n_chunks // unroll
    cdtype = src_ref.dtype
    dn = (((1,), (1,)), ((), ()))  # contract the voxel (lane) axis of both operands

    @pl.when(pl.program_id(2) == 0)
    def _():
        s_ref[...] = jnp.zeros_like(s_ref)
        t_ref[...] = jnp.zeros_like(t_ref)
        cnt_ref[...] = jnp.zeros_like(cnt_ref)

    # Loop invariants hoisted out of the chunk loop (JAX does not CSE iota/broadcast).
    classes = lax.broadcasted_iota(jnp.int32, (nc, chunk), 0)    # (NC, chunk)
    lane_ids = lax.broadcasted_iota(jnp.int32, (1, chunk), 1)    # (1, chunk)
    # Logical (unclamped) flat tile index; the index_map clamps the DMA to stay in
    # bounds, here we instead mask every lane >= v_total to contribute zero.
    base = (pl.program_id(1) * tiles_per_shard + pl.program_id(2)) * tv

    def chunk_body(ci):
        off = pl.multiple_of(ci * chunk, chunk)
        valid = (base + off + lane_ids) < v_total                # (1, chunk) bool
        gt = gt_ref[:, pl.ds(off, chunk)].astype(jnp.int32)      # (1, chunk)
        onehot_b = jnp.logical_and(gt == classes, valid)         # (NC, chunk)
        onehot_t = onehot_b.astype(cdtype)
        # Mask the logits too: 0 * NaN from out-of-bounds lanes would poison the MXU.
        src = jnp.where(valid, src_ref[:, pl.ds(off, chunk)], 0)  # (C, chunk)
        tgt = jnp.where(valid, tgt_ref[:, pl.ds(off, chunk)], 0)
        s_ref[...] += lax.dot_general(onehot_t, src, dn,
                                      preferred_element_type=jnp.float32)
        t_ref[...] += lax.dot_general(onehot_t, tgt, dn,
                                      preferred_element_type=jnp.float32)
        cnt_ref[...] += jnp.sum(onehot_b.astype(jnp.float32), axis=-1, keepdims=True)

    def outer_body(oi, carry):
        for u in range(unroll):          # bounded unroll: LLO visibility w/o code blowup
            chunk_body(oi * unroll + u)
        return carry

    lax.fori_loop(0, n_outer, outer_body, 0, unroll=False)


def kd_cost_pallas(source_logits, source_gt, target_logits, n_class, *,
                   target_step_bytes=4 * 1024 * 1024, tile_v=None, chunk=1024,
                   v_shards=2):
    """source_logits/target_logits: (N, C, D, H, W); source_gt: (N, 1, D, H, W)."""
    N, C, D, H, W = source_logits.shape
    assert C == n_class

    # bf16 logits stay bf16 in HBM (halves traffic); everything else f32.
    cdtype = jnp.bfloat16 if source_logits.dtype == jnp.bfloat16 else jnp.float32
    itemsize = jnp.dtype(cdtype).itemsize

    V = D * H * W
    src = source_logits.reshape(N, C, V).astype(cdtype)   # reshape only, no transpose
    tgt = target_logits.reshape(N, C, V).astype(cdtype)
    gt_dtype = jnp.int8 if n_class <= 127 else jnp.int32   # narrow labels: less HBM traffic
    gt = source_gt.reshape(N, 1, V).astype(gt_dtype)
    gt_itemsize = jnp.dtype(gt_dtype).itemsize

    # --- tile sizing: ~target_step_bytes of HBM traffic per grid step -------------
    bytes_per_lane = 2 * C * itemsize + gt_itemsize
    v_lanes = pl.cdiv(V, _LANE) * _LANE
    if tile_v is None:
        tile_v = target_step_bytes // bytes_per_lane
    # keep double-buffered input blocks v7x-safe (<= ~24 MiB in flight)
    tile_v = min(tile_v, (24 * 1024 * 1024) // (2 * bytes_per_lane))
    tile_v = min(tile_v, v_lanes)
    tile_v = max(_LANE, (tile_v // _LANE) * _LANE)
    chunk = min(chunk, tile_v)
    tile_v = (tile_v // chunk) * chunk
    n_chunks = tile_v // chunk
    unroll = 4 if n_chunks % 4 == 0 else (2 if n_chunks % 2 == 0 else 1)

    # --- V sharding (second parallel axis -> uses both v7x TensorCores for N==1) ---
    n_total_tiles = pl.cdiv(V, tile_v)          # every tile's start lane is < V
    n_shards = max(1, min(v_shards, n_total_tiles))
    tiles_per_shard = pl.cdiv(n_total_tiles, n_shards)
    last_tile = n_total_tiles - 1
    grid = (N, n_shards, tiles_per_shard)

    # --- VMEM budget: actual need (double-buffered inputs) + slack ------------------
    in_block_bytes = bytes_per_lane * tile_v
    vmem_limit = int(max(16 * 1024 * 1024,
                         min(2 * in_block_bytes + (8 << 20), 64 * 1024 * 1024)))

    def v_map(n, s, t, T=tiles_per_shard, L=last_tile):
        # Clamp so the DMA never starts past the array end; the duplicated tile's
        # contribution is masked to zero in-kernel (its logical base >= V).
        return (n, 0, jnp.minimum(s * T + t, L))

    out_map = lambda n, s, t: (n, s, 0, 0)

    s_part, t_part, cnt_part = pl.pallas_call(
        functools.partial(_kd_partial_kernel, chunk=chunk, unroll=unroll,
                          v_total=V, tiles_per_shard=tiles_per_shard),
        out_shape=(
            jax.ShapeDtypeStruct((N, n_shards, n_class, C), jnp.float32),
            jax.ShapeDtypeStruct((N, n_shards, n_class, C), jnp.float32),
            jax.ShapeDtypeStruct((N, n_shards, n_class, 1), jnp.float32),
        ),
        grid_spec=pltpu.PrefetchScalarGridSpec(
            num_scalar_prefetch=0,
            grid=grid,
            in_specs=[
                pl.BlockSpec((None, 1, tile_v), v_map),
                pl.BlockSpec((None, C, tile_v), v_map),
                pl.BlockSpec((None, C, tile_v), v_map),
            ],
            out_specs=(
                pl.BlockSpec((None, None, n_class, C), out_map),
                pl.BlockSpec((None, None, n_class, C), out_map),
                pl.BlockSpec((None, None, n_class, 1), out_map),
            ),
        ),
        compiler_params=pltpu.CompilerParams(
            dimension_semantics=("parallel", "parallel", "arbitrary"),
            vmem_limit_bytes=vmem_limit,
        ),
    )(gt, src, tgt)

    # Tiny (n_class x n_class) epilogue in plain JAX: combine partials over
    # (sample, shard), temperature softmax, symmetric KL — matches the PyTorch
    # forward exactly (including its log(p/q) numerics and the eps on the count).
    s_sum = jnp.sum(s_part, axis=(0, 1))         # (NC, C)
    t_sum = jnp.sum(t_part, axis=(0, 1))
    cnt = jnp.sum(cnt_part, axis=(0, 1))         # (NC, 1)
    denom = cnt + jnp.float32(_EPS)
    s_avg = s_sum / denom
    t_avg = t_sum / denom
    sp = jax.nn.softmax(s_avg / jnp.float32(_TEMPERATURE), axis=-1)
    tp = jax.nn.softmax(t_avg / jnp.float32(_TEMPERATURE), axis=-1)
    kd = 0.5 * (jnp.sum(sp * jnp.log(sp / tp)) + jnp.sum(tp * jnp.log(tp / sp)))
    return kd / jnp.float32(n_class)


def kd_cost_ref(source_logits, source_gt, target_logits, n_class):
    """Pure-JAX reference matching the PyTorch forward."""
    temperature = 2.0
    eps = 1e-6
    kd = jnp.float32(0.0)
    src = source_logits.astype(jnp.float32)
    tgt = target_logits.astype(jnp.float32)
    for i in range(n_class):
        mask = (source_gt == i).astype(jnp.float32)               # (N,1,D,H,W)
        s_sum = jnp.sum(src * mask, axis=(0, 2, 3, 4))
        t_sum = jnp.sum(tgt * mask, axis=(0, 2, 3, 4))
        cnt = jnp.sum((source_gt == i).astype(jnp.float32))
        s_avg = s_sum / (cnt + eps)
        t_avg = t_sum / (cnt + eps)
        sp = jax.nn.softmax(s_avg / temperature)
        tp = jax.nn.softmax(t_avg / temperature)
        kd = kd + (jnp.sum(sp * jnp.log(sp / tp)) + jnp.sum(tp * jnp.log(tp / sp))) / 2.0
    return kd / n_class


if __name__ == "__main__":
    key = jax.random.PRNGKey(0)
    k1, k2, k3 = jax.random.split(key, 3)

    n_class = 4
    N, D, H, W = 2, 4, 8, 8
    source_logits = jax.random.normal(k1, (N, n_class, D, H, W), dtype=jnp.float32)
    target_logits = jax.random.normal(k2, (N, n_class, D, H, W), dtype=jnp.float32)
    source_gt = jax.random.randint(k3, (N, 1, D, H, W), 0, n_class, dtype=jnp.int32)

    loss = jax.block_until_ready(
        kd_cost_pallas(source_logits, source_gt, target_logits, n_class))
    ref = jax.block_until_ready(
        kd_cost_ref(source_logits, source_gt, target_logits, n_class))
    assert jnp.allclose(loss, ref, rtol=1e-4, atol=1e-5), (loss, ref)

    # Second small case: V = 368 (not a multiple of 128) with an explicit 128-lane
    # tile -> exercises the no-pad tail masking, the 2-shard parallel axis (v7x
    # dual-core path with N=1) and the clamped duplicate tile.
    N2, D2, H2, W2 = 1, 2, 8, 23
    sl2 = jax.random.normal(jax.random.PRNGKey(1), (N2, n_class, D2, H2, W2),
                            dtype=jnp.float32)
    tl2 = jax.random.normal(jax.random.PRNGKey(2), (N2, n_class, D2, H2, W2),
                            dtype=jnp.float32)
    gt2 = jax.random.randint(jax.random.PRNGKey(3), (N2, 1, D2, H2, W2), 0, n_class,
                             dtype=jnp.int32)
    loss2 = jax.block_until_ready(kd_cost_pallas(sl2, gt2, tl2, n_class, tile_v=128))
    ref2 = jax.block_until_ready(kd_cost_ref(sl2, gt2, tl2, n_class))
    assert jnp.allclose(loss2, ref2, rtol=1e-4, atol=1e-5), (loss2, ref2)

    print("KERNEL_OK")
</pallas_src>

<mosaic_0001>
module attributes {stable_mosaic.version = 11 : i64} {
  func.func @_kd_partial_kernel(%arg0: i32, %arg1: i32, %arg2: i32, %arg3: memref<1x1x256xi8, #tpu.memory_space<vmem>>, %arg4: memref<1x4x256xf32, #tpu.memory_space<vmem>>, %arg5: memref<1x4x256xf32, #tpu.memory_space<vmem>>, %arg6: memref<1x1x4x4xf32, #tpu.memory_space<vmem>>, %arg7: memref<1x1x4x4xf32, #tpu.memory_space<vmem>>, %arg8: memref<1x1x4x1xf32, #tpu.memory_space<vmem>>) attributes {dimension_semantics = [#tpu.dimension_semantics<parallel>, #tpu.dimension_semantics<parallel>, #tpu.dimension_semantics<arbitrary>], iteration_bounds = array<i64: 2, 1, 1>, scalar_prefetch = 0 : i64, scratch_operands = 0 : i64, tpu.core_type = #tpu.core_type<tc>, window_params = [{transform_indices = @transform_0, window_bounds = array<i64: 1, 1, 256>}, {transform_indices = @transform_1, window_bounds = array<i64: 1, 4, 256>}, {transform_indices = @transform_2, window_bounds = array<i64: 1, 4, 256>}, {transform_indices = @transform_3, window_bounds = array<i64: 1, 1, 4, 4>}, {transform_indices = @transform_4, window_bounds = array<i64: 1, 1, 4, 4>}, {transform_indices = @transform_5, window_bounds = array<i64: 1, 1, 4, 1>}]} {
    %c0_i32 = arith.constant 0 : i32
    %0 = arith.cmpi eq, %arg2, %c0_i32 : i32
    %1 = arith.extui %0 : i1 to i32
    %c0_i32_0 = arith.constant 0 : i32
    %2 = arith.cmpi ne, %1, %c0_i32_0 : i32
    scf.if %2 {
      %cst_40 = arith.constant 0.000000e+00 : f32
      %67 = vector.broadcast %cst_40 : f32 to vector<4x4xf32>
      %c0_41 = arith.constant 0 : index
      %c0_42 = arith.constant 0 : index
      %c0_43 = arith.constant 0 : index
      %c0_44 = arith.constant 0 : index
      %68 = vector.load %arg6[%c0_41, %c0_42, %c0_43, %c0_44] : memref<1x1x4x4xf32, #tpu.memory_space<vmem>>, vector<1x1x4x4xf32>
      %69 = vector.shape_cast %68 : vector<1x1x4x4xf32> to vector<4x4xf32>
      %70 = vector.shape_cast %67 : vector<4x4xf32> to vector<1x1x4x4xf32>
      tpu.vector_store %arg6[%c0_41, %c0_42, %c0_43, %c0_44], %70 {strides = array<i32>} : memref<1x1x4x4xf32, #tpu.memory_space<vmem>>, vector<1x1x4x4xf32>,
      %cst_45 = arith.constant 0.000000e+00 : f32
      %71 = vector.broadcast %cst_45 : f32 to vector<4x4xf32>
      %c0_46 = arith.constant 0 : index
      %c0_47 = arith.constant 0 : index
      %c0_48 = arith.constant 0 : index
      %c0_49 = arith.constant 0 : index
      %72 = vector.load %arg7[%c0_46, %c0_47, %c0_48, %c0_49] : memref<1x1x4x4xf32, #tpu.memory_space<vmem>>, vector<1x1x4x4xf32>
      %73 = vector.shape_cast %72 : vector<1x1x4x4xf32> to vector<4x4xf32>
      %74 = vector.shape_cast %71 : vector<4x4xf32> to vector<1x1x4x4xf32>
      tpu.vector_store %arg7[%c0_46, %c0_47, %c0_48, %c0_49], %74 {strides = array<i32>} : memref<1x1x4x4xf32, #tpu.memory_space<vmem>>, vector<1x1x4x4xf32>,
      %cst_50 = arith.constant 0.000000e+00 : f32
      %75 = vector.broadcast %cst_50 : f32 to vector<4x1xf32>
      %c0_51 = arith.constant 0 : index
      %c0_52 = arith.constant 0 : index
      %c0_53 = arith.constant 0 : index
      %c0_54 = arith.constant 0 : index
      %76 = vector.load %arg8[%c0_51, %c0_52, %c0_53, %c0_54] : memref<1x1x4x1xf32, #tpu.memory_space<vmem>>, vector<1x1x4x1xf32>
      %77 = vector.shape_cast %76 : vector<1x1x4x1xf32> to vector<4x1xf32>
      %78 = vector.shape_cast %75 : vector<4x1xf32> to vector<1x1x4x1xf32>
      tpu.vector_store %arg8[%c0_51, %c0_52, %c0_53, %c0_54], %78 {strides = array<i32>} : memref<1x1x4x1xf32, #tpu.memory_space<vmem>>, vector<1x1x4x1xf32>,
    } else {
    }
    %3 = tpu.iota {dimensions = array<i32: 0>} : vector<4x256xi32>
    %4 = tpu.iota {dimensions = array<i32: 1>} : vector<1x256xi32>
    %c1_i32 = arith.constant 1 : i32
    %5 = arith.muli %arg1, %c1_i32 : i32
    %6 = arith.addi %5, %arg2 : i32
    %c256_i32 = arith.constant 256 : i32
    %7 = arith.muli %6, %c256_i32 : i32
    %c0_i32_1 = arith.constant 0 : i32
    %c1_i32_2 = arith.constant 1 : i32
    %8 = arith.muli %c0_i32_1, %c1_i32_2 : i32
    %c0_i32_3 = arith.constant 0 : i32
    %9 = arith.addi %8, %c0_i32_3 : i32
    %c256_i32_4 = arith.constant 256 : i32
    %10 = arith.muli %9, %c256_i32_4 : i32
    %11 = tpu.assume_multiple %10, 256 : i32
    %12 = arith.addi %7, %11 : i32
    %13 = vector.broadcast %12 : i32 to vector<1x256xi32>
    %14 = arith.addi %13, %4 : vector<1x256xi32>
    %c256_i32_5 = arith.constant 256 : i32
    %15 = vector.broadcast %c256_i32_5 : i32 to vector<1x256xi32>
    %16 = arith.cmpi slt, %14, %15 : vector<1x256xi32>
    %c0 = arith.constant 0 : index
    %c0_6 = arith.constant 0 : index
    %17 = arith.index_cast %11 : i32 to index
    %18 = vector.load %arg3[%c0, %c0_6, %17] : memref<1x1x256xi8, #tpu.memory_space<vmem>>, vector<1x1x256xi8>
    %19 = vector.shape_cast %18 : vector<1x1x256xi8> to vector<1x256xi8>
    %20 = arith.extsi %19 : vector<1x256xi8> to vector<1x256xi32>
    %21 = vector.broadcast %20 : vector<1x256xi32> to vector<4x256xi32>
    %22 = arith.cmpi eq, %21, %3 : vector<4x256xi32>
    %23 = vector.broadcast %16 : vector<1x256xi1> to vector<4x256xi1>
    %24 = arith.andi %22, %23 : vector<4x256xi1>
    %25 = arith.extui %24 : vector<4x256xi1> to vector<4x256xi32>
    %26 = arith.sitofp %25 : vector<4x256xi32> to vector<4x256xf32>
    %c0_7 = arith.constant 0 : index
    %c0_8 = arith.constant 0 : index
    %27 = arith.index_cast %11 : i32 to index
    %28 = vector.load %arg4[%c0_7, %c0_8, %27] : memref<1x4x256xf32, #tpu.memory_space<vmem>>, vector<1x4x256xf32>
    %29 = vector.shape_cast %28 : vector<1x4x256xf32> to vector<4x256xf32>
    %c0_i32_9 = arith.constant 0 : i32
    %30 = arith.sitofp %c0_i32_9 : i32 to f32
    %31 = vector.shape_cast %16 : vector<1x256xi1> to vector<1x256xi1>
    %32 = vector.broadcast %31 : vector<1x256xi1> to vector<4x256xi1>
    %33 = vector.broadcast %30 : f32 to vector<4x256xf32>
    %34 = arith.select %32, %29, %33 : vector<4x256xi1>, vector<4x256xf32>
    %c0_10 = arith.constant 0 : index
    %c0_11 = arith.constant 0 : index
    %35 = arith.index_cast %11 : i32 to index
    %36 = vector.load %arg5[%c0_10, %c0_11, %35] : memref<1x4x256xf32, #tpu.memory_space<vmem>>, vector<1x4x256xf32>
    %37 = vector.shape_cast %36 : vector<1x4x256xf32> to vector<4x256xf32>
    %c0_i32_12 = arith.constant 0 : i32
    %38 = arith.sitofp %c0_i32_12 : i32 to f32
    %39 = vector.shape_cast %16 : vector<1x256xi1> to vector<1x256xi1>
    %40 = vector.broadcast %39 : vector<1x256xi1> to vector<4x256xi1>
    %41 = vector.broadcast %38 : f32 to vector<4x256xf32>
    %42 = arith.select %40, %37, %41 : vector<4x256xi1>, vector<4x256xf32>
    %c0_13 = arith.constant 0 : index
    %c0_14 = arith.constant 0 : index
    %c0_15 = arith.constant 0 : index
    %c0_16 = arith.constant 0 : index
    %43 = vector.load %arg6[%c0_13, %c0_14, %c0_15, %c0_16] : memref<1x1x4x4xf32, #tpu.memory_space<vmem>>, vector<1x1x4x4xf32>
    %44 = vector.shape_cast %43 : vector<1x1x4x4xf32> to vector<4x4xf32>
    %cst = arith.constant dense<0.000000e+00> : vector<4x4xf32>
    %45 = tpu.matmul %26, %34, %cst {dimension_numbers = #tpu.dot_dimension_numbers<[1], [1], [0], [0], [0, 0, 1, 0], [], []>} : vector<4x256xf32>, vector<4x256xf32>, vector<4x4xf32> -> vector<4x4xf32>
    %46 = arith.addf %44, %45 : vector<4x4xf32>
    %c0_17 = arith.constant 0 : index
    %c0_18 = arith.constant 0 : index
    %c0_19 = arith.constant 0 : index
    %c0_20 = arith.constant 0 : index
    %47 = vector.load %arg6[%c0_17, %c0_18, %c0_19, %c0_20] : memref<1x1x4x4xf32, #tpu.memory_space<vmem>>, vector<1x1x4x4xf32>
    %48 = vector.shape_cast %47 : vector<1x1x4x4xf32> to vector<4x4xf32>
    %49 = vector.shape_cast %46 : vector<4x4xf32> to vector<1x1x4x4xf32>
    tpu.vector_store %arg6[%c0_17, %c0_18, %c0_19, %c0_20], %49 {strides = array<i32>} : memref<1x1x4x4xf32, #tpu.memory_space<vmem>>, vector<1x1x4x4xf32>,
    %c0_21 = arith.constant 0 : index
    %c0_22 = arith.constant 0 : index
    %c0_23 = arith.constant 0 : index
    %c0_24 = arith.constant 0 : index
    %50 = vector.load %arg7[%c0_21, %c0_22, %c0_23, %c0_24] : memref<1x1x4x4xf32, #tpu.memory_space<vmem>>, vector<1x1x4x4xf32>
    %51 = vector.shape_cast %50 : vector<1x1x4x4xf32> to vector<4x4xf32>
    %cst_25 = arith.constant dense<0.000000e+00> : vector<4x4xf32>
    %52 = tpu.matmul %26, %42, %cst_25 {dimension_numbers = #tpu.dot_dimension_numbers<[1], [1], [0], [0], [0, 0, 1, 0], [], []>} : vector<4x256xf32>, vector<4x256xf32>, vector<4x4xf32> -> vector<4x4xf32>
    %53 = arith.addf %51, %52 : vector<4x4xf32>
    %c0_26 = arith.constant 0 : index
    %c0_27 = arith.constant 0 : index
    %c0_28 = arith.constant 0 : index
    %c0_29 = arith.constant 0 : index
    %54 = vector.load %arg7[%c0_26, %c0_27, %c0_28, %c0_29] : memref<1x1x4x4xf32, #tpu.memory_space<vmem>>, vector<1x1x4x4xf32>
    %55 = vector.shape_cast %54 : vector<1x1x4x4xf32> to vector<4x4xf32>
    %56 = vector.shape_cast %53 : vector<4x4xf32> to vector<1x1x4x4xf32>
    tpu.vector_store %arg7[%c0_26, %c0_27, %c0_28, %c0_29], %56 {strides = array<i32>} : memref<1x1x4x4xf32, #tpu.memory_space<vmem>>, vector<1x1x4x4xf32>,
    %c0_30 = arith.constant 0 : index
    %c0_31 = arith.constant 0 : index
    %c0_32 = arith.constant 0 : index
    %c0_33 = arith.constant 0 : index
    %57 = vector.load %arg8[%c0_30, %c0_31, %c0_32, %c0_33] : memref<1x1x4x1xf32, #tpu.memory_space<vmem>>, vector<1x1x4x1xf32>
    %58 = vector.shape_cast %57 : vector<1x1x4x1xf32> to vector<4x1xf32>
    %59 = arith.extui %24 : vector<4x256xi1> to vector<4x256xi32>
    %60 = arith.sitofp %59 : vector<4x256xi32> to vector<4x256xf32>
    %cst_34 = arith.constant dense<0.000000e+00> : vector<4xf32>
    %61 = vector.multi_reduction <add>, %60, %cst_34 [1] : vector<4x256xf32> to vector<4xf32>
    %62 = vector.shape_cast %61 : vector<4xf32> to vector<4x1xf32>
    %63 = arith.addf %58, %62 : vector<4x1xf32>
    %c0_35 = arith.constant 0 : index
    %c0_36 = arith.constant 0 : index
    %c0_37 = arith.constant 0 : index
    %c0_38 = arith.constant 0 : index
    %64 = vector.load %arg8[%c0_35, %c0_36, %c0_37, %c0_38] : memref<1x1x4x1xf32, #tpu.memory_space<vmem>>, vector<1x1x4x1xf32>
    %65 = vector.shape_cast %64 : vector<1x1x4x1xf32> to vector<4x1xf32>
    %66 = vector.shape_cast %63 : vector<4x1xf32> to vector<1x1x4x1xf32>
    tpu.vector_store %arg8[%c0_35, %c0_36, %c0_37, %c0_38], %66 {strides = array<i32>} : memref<1x1x4x1xf32, #tpu.memory_space<vmem>>, vector<1x1x4x1xf32>,
    %c1_i32_39 = arith.constant 1 : i32
    return
  }
  func.func @transform_0(%arg0: i32, %arg1: i32, %arg2: i32) -> (i32, i32, i32) {
    %c1_i32 = arith.constant 1 : i32
    %0 = arith.muli %arg1, %c1_i32 : i32
    %1 = arith.addi %0, %arg2 : i32
    %c0_i32 = arith.constant 0 : i32
    %2 = arith.minsi %1, %c0_i32 : i32
    %c0_i32_0 = arith.constant 0 : i32
    %c0_i32_1 = arith.constant 0 : i32
    return %arg0, %c0_i32_0, %2 : i32, i32, i32
  }
  func.func @transform_1(%arg0: i32, %arg1: i32, %arg2: i32) -> (i32, i32, i32) {
    %c1_i32 = arith.constant 1 : i32
    %0 = arith.muli %arg1, %c1_i32 : i32
    %1 = arith.addi %0, %arg2 : i32
    %c0_i32 = arith.constant 0 : i32
    %2 = arith.minsi %1, %c0_i32 : i32
    %c0_i32_0 = arith.constant 0 : i32
    %c0_i32_1 = arith.constant 0 : i32
    return %arg0, %c0_i32_0, %2 : i32, i32, i32
  }
  func.func @transform_2(%arg0: i32, %arg1: i32, %arg2: i32) -> (i32, i32, i32) {
    %c1_i32 = arith.constant 1 : i32
    %0 = arith.muli %arg1, %c1_i32 : i32
    %1 = arith.addi %0, %arg2 : i32
    %c0_i32 = arith.constant 0 : i32
    %2 = arith.minsi %1, %c0_i32 : i32
    %c0_i32_0 = arith.constant 0 : i32
    %c0_i32_1 = arith.constant 0 : i32
    return %arg0, %c0_i32_0, %2 : i32, i32, i32
  }
  func.func @transform_3(%arg0: i32, %arg1: i32, %arg2: i32) -> (i32, i32, i32, i32) {
    %c0_i32 = arith.constant 0 : i32
    %c0_i32_0 = arith.constant 0 : i32
    %c0_i32_1 = arith.constant 0 : i32
    return %arg0, %arg1, %c0_i32, %c0_i32_0 : i32, i32, i32, i32
  }
  func.func @transform_4(%arg0: i32, %arg1: i32, %arg2: i32) -> (i32, i32, i32, i32) {
    %c0_i32 = arith.constant 0 : i32
    %c0_i32_0 = arith.constant 0 : i32
    %c0_i32_1 = arith.constant 0 : i32
    return %arg0, %arg1, %c0_i32, %c0_i32_0 : i32, i32, i32, i32
  }
  func.func @transform_5(%arg0: i32, %arg1: i32, %arg2: i32) -> (i32, i32, i32, i32) {
    %c0_i32 = arith.constant 0 : i32
    %c0_i32_0 = arith.constant 0 : i32
    %c0_i32_1 = arith.constant 0 : i32
    return %arg0, %arg1, %c0_i32, %c0_i32_0 : i32, i32, i32, i32
  }
}

</mosaic_0001>

<llo_original>
// kernel: tpu_custom_call.1
$region0: #{tpu_custom_call.1}
  #allocation0 [shape = 'u32[]', space=smem, size = 0x4, offset = 0x4, fixed_abs, tag = 'smem constant byte address 0x4 - core index']
  #allocation1 [shape = 'u32[144,128]{1,0:T(1,128)}', space=vmem, size = 0x12000, scoped, tag = 'internal scratch']
  %s0 = inlined_call_operand.vmem [shape: s8[2,1,256], index: 0, kind: input, shape index: {}]
  %s1 = inlined_call_operand.hbm [shape: f32[2,4,256], index: 1, kind: input, shape index: {}]
  %s2 = inlined_call_operand.hbm [shape: f32[2,4,256], index: 2, kind: input, shape index: {}]
  %s3 = inlined_call_operand.hbm [shape: f32[2,1,4,4], index: 3, kind: output, shape index: {0}]
  %s4 = inlined_call_operand.hbm [shape: f32[2,1,4,4], index: 4, kind: output, shape index: {1}]
  %s5 = inlined_call_operand.vmem [shape: f32[2,1,4,1], index: 5, kind: output, shape index: {2}]
  %6 = xla_tuple %s3, %s4, %s5
  %s7 = sld [smem:[#allocation0]]
  $region73: #{tpu_custom_call.1} parent=0
    _
  %s9 = ssub.s32 1, %s7
  %s10 = scalar_select 0, %s9, %s7
  $region1: #{tpu_custom_call.1} parent=0
    #allocation2 [shape = 'u8[8192]{0}', space=vmem, size = 0x2000, scoped, tag = 'input window, operand 1']
    #allocation3 [shape = 's32[2]{0}', space=sflag, size = 0x8, scoped, tag = 'scoped memory for tpu_custom_call.1']
    #allocation4 [shape = 's32[2]{0}', space=sflag, size = 0x8, scoped, tag = 'scoped memory for tpu_custom_call.1']
    #allocation5 [shape = 'u8[8192]{0}', space=vmem, size = 0x2000, scoped, tag = 'input window, operand 2']
    #allocation6 [shape = 's32[2]{0}', space=sflag, size = 0x8, scoped, tag = 'scoped memory for tpu_custom_call.1']
    #allocation7 [shape = 'u8[4096]{0}', space=vmem, size = 0x1000, scoped, tag = 'output window, operand 0']
    #allocation8 [shape = 'u8[4096]{0}', space=vmem, size = 0x1000, scoped, tag = 'output window, operand 1']
    #allocation9 [shape = 's32[2]{0}', space=sflag, size = 0x8, scoped, tag = 'scoped memory for tpu_custom_call.1']
    %11 = vsyncpa [#allocation3], 0
    %s12 = scalar_lea.sflag [#allocation3], 1
    %13 = vsyncpa %s12, 0
    %14 = vsyncpa [#allocation6], 0
    %s15 = scalar_lea.sflag [#allocation6], 1
    %16 = vsyncpa %s15, 0
    %17 = vsyncpa [#allocation4], 0
    %s18 = scalar_lea.sflag [#allocation4], 1
    %19 = vsyncpa %s18, 0
    %20 = vsyncpa [#allocation9], 0
    %s21 = scalar_lea.sflag [#allocation9], 1
    %22 = vsyncpa %s21, 0
    loop: start=0, step=1, limit=4
    $region2: #{tpu_custom_call.1} parent=1 // loop_pre_header
      _
    $region3: #{tpu_custom_call.1} parent=1 // loop_header
      %s24 = sphi 0, %s28
      %p25 = scmp.ge.s32.totalorder %s24, 4
      %s31 = sphi 0, %s50
      %s32 = sphi 0, %s46
      %s33 = sphi 0, %s42
      %s34 = sphi 0, %s31
      %s35 = sphi 0, %s32
      %s36 = sphi 0, %s33
      %s37 = sphi 0, %s34
      %s38 = sphi 0, %s35
      %s39 = sphi 0, %s36
      %s61 = sphi 0, %s63
      %s64 = sphi 0, %s61
      %s65 = sphi 0, %s64
      %s81 = sphi 0, %s65
      %s95 = sphi 0, %s97
      %s98 = sphi 0, %s95
      %s99 = sphi 0, %s98
      %s115 = sphi 0, %s99
      %s129 = sphi 0, %s131
      %s132 = sphi 0, %s129
      %s133 = sphi 0, %s132
      %s149 = sphi 0, %s133
      %s157 = sphi 0, %s159
      %s160 = sphi 0, %s157
      %s161 = sphi 0, %s160
      %s177 = sphi 0, %s161
      %s185 = sphi 0, %s187
      %s188 = sphi 0, %s185
      %s189 = sphi 0, %s188
      %s205 = sphi 0, %s189
      %s213 = sphi 0, %s215
      %s216 = sphi 0, %s213
      %s217 = sphi 0, %s216
      %s233 = sphi 0, %s217
    $region4: #{tpu_custom_call.1} parent=1 // loop_header_branch
      %27 = sbr.rel (%p25) target = $region8
    $region5: #{tpu_custom_call.1} parent=1 // loop_body
      %s29 = ssub.s32 %s24, 1
      %s30 = ssub.s32 %s24, 2
      %s40 = sadd.s32 1, %s33
      %p41 = scmp.ge.s32.totalorder %s40, 1
      %s42 = scalar_select %p41, 0, %s40
      %s43 = sadd.s32 1, %s32
      %s44 = scalar_select %p41, %s43, %s32
      %p45 = scmp.ge.s32.totalorder %s44, 1
      %s46 = scalar_select %p45, 0, %s44
      %s47 = sadd.s32 1, %s31
      %s48 = scalar_select %p45, %s47, %s31
      %p49 = scmp.ge.s32.totalorder %s48, 2
      %s50 = scalar_select %p49, 0, %s48
      %s51 = sadd.s32 %s32, %s33
      %p52 = scmp.lt.s32.totalorder %s51, 0
      %s53 = scalar_select %p52, %s51, 0
      %s54 = sadd.s32 %s46, %s42
      %p55 = scmp.lt.s32.totalorder %s54, 0
      %s56 = scalar_select %p55, %s54, 0
      %s57 = ssub.s32 %s31, %s50
      %s58 = ssub.s32 %s53, %s56
      %s59 = sor.u32 %s57, %s58
      %p60 = scmp.eq.s32.totalorder %s59, 0
      %s62 = sadd.s32 %s61, 1
      %s63 = scalar_select %p60, %s61, %s62
      %p66 = pneg %p60
      %p67 = scmp.eq.s32.totalorder %s24, 1
      %p68 = por %p66, %p67
      %p69 = scmp.ne.s32.totalorder %s61, %s64
      %p70 = scmp.eq.s32.totalorder %s24, 0
      %p71 = por %p69, %p70
      %p72 = scmp.ne.s32.totalorder %s61, %s64
      %p73 = scmp.eq.s32.totalorder %s29, 1
      %p74 = por %p72, %p73
      %p75 = scmp.ne.s32.totalorder %s64, %s65
      %p76 = scmp.eq.s32.totalorder %s29, 0
      %p77 = por %p75, %p76
      %p78 = scmp.ne.s32.totalorder %s64, %s65
      %p79 = scmp.eq.s32.totalorder %s30, 1
      %p80 = por %p78, %p79
      %p82 = scmp.ne.s32.totalorder %s65, %s81
      %p83 = scmp.eq.s32.totalorder %s30, 0
      %p84 = por %p82, %p83
      %s85 = sadd.s32 %s32, %s33
      %p86 = scmp.lt.s32.totalorder %s85, 0
      %s87 = scalar_select %p86, %s85, 0
      %s88 = sadd.s32 %s46, %s42
      %p89 = scmp.lt.s32.totalorder %s88, 0
      %s90 = scalar_select %p89, %s88, 0
      %s91 = ssub.s32 %s31, %s50
      %s92 = ssub.s32 %s87, %s90
      %s93 = sor.u32 %s91, %s92
      %p94 = scmp.eq.s32.totalorder %s93, 0
      %s96 = sadd.s32 %s95, 1
      %s97 = scalar_select %p94, %s95, %s96
      %p100 = pneg %p94
      %p101 = scmp.eq.s32.totalorder %s24, 1
      %p102 = por %p100, %p101
      %p103 = scmp.ne.s32.totalorder %s95, %s98
      %p104 = scmp.eq.s32.totalorder %s24, 0
      %p105 = por %p103, %p104
      %p106 = scmp.ne.s32.totalorder %s95, %s98
      %p107 = scmp.eq.s32.totalorder %s29, 1
      %p108 = por %p106, %p107
      %p109 = scmp.ne.s32.totalorder %s98, %s99
      %p110 = scmp.eq.s32.totalorder %s29, 0
      %p111 = por %p109, %p110
      %p112 = scmp.ne.s32.totalorder %s98, %s99
      %p113 = scmp.eq.s32.totalorder %s30, 1
      %p114 = por %p112, %p113
      %p116 = scmp.ne.s32.totalorder %s99, %s115
      %p117 = scmp.eq.s32.totalorder %s30, 0
      %p118 = por %p116, %p117
      %s119 = sadd.s32 %s32, %s33
      %p120 = scmp.lt.s32.totalorder %s119, 0
      %s121 = scalar_select %p120, %s119, 0
      %s122 = sadd.s32 %s46, %s42
      %p123 = scmp.lt.s32.totalorder %s122, 0
      %s124 = scalar_select %p123, %s122, 0
      %s125 = ssub.s32 %s31, %s50
      %s126 = ssub.s32 %s121, %s124
      %s127 = sor.u32 %s125, %s126
      %p128 = scmp.eq.s32.totalorder %s127, 0
      %s130 = sadd.s32 %s129, 1
      %s131 = scalar_select %p128, %s129, %s130
      %p134 = pneg %p128
      %p135 = scmp.eq.s32.totalorder %s24, 1
      %p136 = por %p134, %p135
      %p137 = scmp.ne.s32.totalorder %s129, %s132
      %p138 = scmp.eq.s32.totalorder %s24, 0
      %p139 = por %p137, %p138
      %p140 = scmp.ne.s32.totalorder %s129, %s132
      %p141 = scmp.eq.s32.totalorder %s29, 1
      %p142 = por %p140, %p141
      %p143 = scmp.ne.s32.totalorder %s132, %s133
      %p144 = scmp.eq.s32.totalorder %s29, 0
      %p145 = por %p143, %p144
      %p146 = scmp.ne.s32.totalorder %s132, %s133
      %p147 = scmp.eq.s32.totalorder %s30, 1
      %p148 = por %p146, %p147
      %p150 = scmp.ne.s32.totalorder %s133, %s149
      %p151 = scmp.eq.s32.totalorder %s30, 0
      %p152 = por %p150, %p151
      %s153 = ssub.s32 %s31, %s50
      %s154 = ssub.s32 %s32, %s46
      %s155 = sor.u32 %s153, %s154
      %p156 = scmp.eq.s32.totalorder %s155, 0
      %s158 = sadd.s32 %s157, 1
      %s159 = scalar_select %p156, %s157, %s158
      %p162 = pneg %p156
      %p163 = scmp.eq.s32.totalorder %s24, 1
      %p164 = por %p162, %p163
      %p165 = scmp.ne.s32.totalorder %s157, %s160
      %p166 = scmp.eq.s32.totalorder %s24, 0
      %p167 = por %p165, %p166
      %p168 = scmp.ne.s32.totalorder %s157, %s160
      %p169 = scmp.eq.s32.totalorder %s29, 1
      %p170 = por %p168, %p169
      %p171 = scmp.ne.s32.totalorder %s160, %s161
      %p172 = scmp.eq.s32.totalorder %s29, 0
      %p173 = por %p171, %p172
      %p174 = scmp.ne.s32.totalorder %s160, %s161
      %p175 = scmp.eq.s32.totalorder %s30, 1
      %p176 = por %p174, %p175
      %p178 = scmp.ne.s32.totalorder %s161, %s177
      %p179 = scmp.eq.s32.totalorder %s30, 0
      %p180 = por %p178, %p179
      %s181 = ssub.s32 %s31, %s50
      %s182 = ssub.s32 %s32, %s46
      %s183 = sor.u32 %s181, %s182
      %p184 = scmp.eq.s32.totalorder %s183, 0
      %s186 = sadd.s32 %s185, 1
      %s187 = scalar_select %p184, %s185, %s186
      %p190 = pneg %p184
      %p191 = scmp.eq.s32.totalorder %s24, 1
      %p192 = por %p190, %p191
      %p193 = scmp.ne.s32.totalorder %s185, %s188
      %p194 = scmp.eq.s32.totalorder %s24, 0
      %p195 = por %p193, %p194
      %p196 = scmp.ne.s32.totalorder %s185, %s188
      %p197 = scmp.eq.s32.totalorder %s29, 1
      %p198 = por %p196, %p197
      %p199 = scmp.ne.s32.totalorder %s188, %s189
      %p200 = scmp.eq.s32.totalorder %s29, 0
      %p201 = por %p199, %p200
      %p202 = scmp.ne.s32.totalorder %s188, %s189
      %p203 = scmp.eq.s32.totalorder %s30, 1
      %p204 = por %p202, %p203
      %p206 = scmp.ne.s32.totalorder %s189, %s205
      %p207 = scmp.eq.s32.totalorder %s30, 0
      %p208 = por %p206, %p207
      %s209 = ssub.s32 %s31, %s50
      %s210 = ssub.s32 %s32, %s46
      %s211 = sor.u32 %s209, %s210
      %p212 = scmp.eq.s32.totalorder %s211, 0
      %s214 = sadd.s32 %s213, 1
      %s215 = scalar_select %p212, %s213, %s214
      %p218 = pneg %p212
      %p219 = scmp.eq.s32.totalorder %s24, 1
      %p220 = por %p218, %p219
      %p221 = scmp.ne.s32.totalorder %s213, %s216
      %p222 = scmp.eq.s32.totalorder %s24, 0
      %p223 = por %p221, %p222
      %p224 = scmp.ne.s32.totalorder %s213, %s216
      %p225 = scmp.eq.s32.totalorder %s29, 1
      %p226 = por %p224, %p225
      %p227 = scmp.ne.s32.totalorder %s216, %s217
      %p228 = scmp.eq.s32.totalorder %s29, 0
      %p229 = por %p227, %p228
      %p230 = scmp.ne.s32.totalorder %s216, %s217
      %p231 = scmp.eq.s32.totalorder %s30, 1
      %p232 = por %p230, %p231
      %p234 = scmp.ne.s32.totalorder %s217, %s233
      %p235 = scmp.eq.s32.totalorder %s30, 0
      %p236 = por %p234, %p235
      %p237 = scmp.le.s32.totalorder 1, %s24
      %p238 = scmp.lt.s32.totalorder %s24, 3
      %p239 = pnand %p237, %p238
      %p240 = pneg %p239
      // Predicated region
      $region9: #{tpu_custom_call.1} parent=5 // pred_check
        _
      $region10: #{tpu_custom_call.1} parent=5 // pred_check_branch
        %242 = sbr.rel (%p239) target = $region12
      $region11: #{tpu_custom_call.1} parent=5 // pred_region
        %s243 = ssub.s32 %s24, 1
      $region12: #{tpu_custom_call.1} parent=5 // pred_fallthru
        _
      %p244 = scmp.lt.s32.totalorder %s24, 2
      // Predicated region
      $region13: #{tpu_custom_call.1} parent=5 // pred_check
        %p245 = pneg %p244
      $region14: #{tpu_custom_call.1} parent=5 // pred_check_branch
        %247 = sbr.rel (%p245) target = $region16
      $region15: #{tpu_custom_call.1} parent=5 // pred_region
        // Predicated region
        $region17: #{tpu_custom_call.1} parent=15 // pred_check
          %p248 = pneg %p71
        $region18: #{tpu_custom_call.1} parent=15 // pred_check_branch
          %250 = sbr.rel (%p248) target = $region20
        $region19: #{tpu_custom_call.1} parent=15 // pred_region
          %s251 = sadd.s32 %s32, %s33
          %p252 = scmp.lt.s32.totalorder %s251, 0
          %s253 = scalar_select %p252, %s251, 0
          %s254 = smul.u32 2, %s253
          %p255 = scmp.lt.s32.totalorder %s31, 1
          %s256 = scalar_select %p255, %s31, 1
          %p257 = scmp.lt.s32.totalorder %s254, 1
          %s258 = scalar_select %p257, %s254, 1
          %s259 = smul.addr %s256, 2
          %s260 = sadd.s32 %s258, %s259
          %s261 = scalar_lea.vmem %s0, %s260
          %s262 = sadd.s32 %s32, %s33
          %p263 = scmp.lt.s32.totalorder %s262, 0
          %s264 = scalar_select %p263, %s262, 0
          %s265 = smul.u32 2, %s264
        $region20: #{tpu_custom_call.1} parent=15 // pred_fallthru
          _
        // Predicated region
        $region21: #{tpu_custom_call.1} parent=15 // pred_check
          %p266 = pneg %p105
        $region22: #{tpu_custom_call.1} parent=15 // pred_check_branch
          %268 = sbr.rel (%p266) target = $region24
        $region23: #{tpu_custom_call.1} parent=15 // pred_region
          %s269 = sand.u32 %s95, 1
          %s270 = scalar_lea.sflag [#allocation3], %s269
          %s271 = sand.u32 %s95, 1
          %s272 = smul.addr %s271, 8
          %s273 = scalar_lea.vmem [#allocation2], %s272
          %s274 = sadd.s32 %s32, %s33
          %p275 = scmp.lt.s32.totalorder %s274, 0
          %s276 = scalar_select %p275, %s274, 0
          %s277 = smul.u32 2, %s276
          %s279 = ssub.s32 128, 128
          %280 = vsyncadd %s270, %s279
          %s281 = smul.addr %s31, 2
          %s282 = sadd.s32 %s277, %s281
          %s283 = smul.addr %s282, 64
          %s284 = scalar_lea.hbm %s1, %s283
          %s286 = sshll.u32 %s273, 4
          %s287 = int_to_ptr.vmem [resolvable:$true] %s286
          %289 = dma.hbm_to_vmem [thread:$0]  %s284, 128, %s287, %s270
        $region24: #{tpu_custom_call.1} parent=15 // pred_fallthru
          _
        // Predicated region
        $region25: #{tpu_custom_call.1} parent=15 // pred_check
          %p290 = pneg %p139
        $region26: #{tpu_custom_call.1} parent=15 // pred_check_branch
          %292 = sbr.rel (%p290) target = $region28
        $region27: #{tpu_custom_call.1} parent=15 // pred_region
          %s293 = sand.u32 %s129, 1
          %s294 = scalar_lea.sflag [#allocation6], %s293
          %s295 = sand.u32 %s129, 1
          %s296 = smul.addr %s295, 8
          %s297 = scalar_lea.vmem [#allocation5], %s296
          %s298 = sadd.s32 %s32, %s33
          %p299 = scmp.lt.s32.totalorder %s298, 0
          %s300 = scalar_select %p299, %s298, 0
          %s301 = smul.u32 2, %s300
          %s303 = ssub.s32 128, 128
          %304 = vsyncadd %s294, %s303
          %s305 = smul.addr %s31, 2
          %s306 = sadd.s32 %s301, %s305
          %s307 = smul.addr %s306, 64
          %s308 = scalar_lea.hbm %s2, %s307
          %s310 = sshll.u32 %s297, 4
          %s311 = int_to_ptr.vmem [resolvable:$true] %s310
          %313 = dma.hbm_to_vmem [thread:$0]  %s308, 128, %s311, %s294
        $region28: #{tpu_custom_call.1} parent=15 // pred_fallthru
          _
      $region16: #{tpu_custom_call.1} parent=5 // pred_fallthru
        _
      %p314 = scmp.le.s32.totalorder 1, %s24
      %p315 = scmp.lt.s32.totalorder %s24, 3
      %p316 = pnand %p314, %p315
      %p317 = pneg %p316
      // Predicated region
      $region29: #{tpu_custom_call.1} parent=5 // pred_check
        _
      $region30: #{tpu_custom_call.1} parent=5 // pred_check_branch
        %319 = sbr.rel (%p316) target = $region32
      $region31: #{tpu_custom_call.1} parent=5 // pred_region
        %s320 = ssub.s32 %s24, 1
        %s321 = sand.u32 %s98, 1
        %s322 = scalar_lea.sflag [#allocation3], %s321
        %s323 = sand.u32 %s98, 1
        %s324 = smul.addr %s323, 8
        %s325 = scalar_lea.vmem [#allocation2], %s324
        // Predicated region
        $region33: #{tpu_custom_call.1} parent=31 // pred_check
          %p326 = pneg %p111
        $region34: #{tpu_custom_call.1} parent=31 // pred_check_branch
          %328 = sbr.rel (%p326) target = $region36
        $region35: #{tpu_custom_call.1} parent=31 // pred_region
          %329 = dma.done %s322, 128
        $region36: #{tpu_custom_call.1} parent=31 // pred_fallthru
          _
        %s330 = sand.u32 %s132, 1
        %s331 = scalar_lea.sflag [#allocation6], %s330
        %s332 = sand.u32 %s132, 1
        %s333 = smul.addr %s332, 8
        %s334 = scalar_lea.vmem [#allocation5], %s333
        // Predicated region
        $region37: #{tpu_custom_call.1} parent=31 // pred_check
          %p335 = pneg %p145
        $region38: #{tpu_custom_call.1} parent=31 // pred_check_branch
          %337 = sbr.rel (%p335) target = $region40
        $region39: #{tpu_custom_call.1} parent=31 // pred_region
          %338 = dma.done %s331, 128
        $region40: #{tpu_custom_call.1} parent=31 // pred_fallthru
          _
        %s339 = sadd.s32 %s35, %s36
        %p340 = scmp.lt.s32.totalorder %s339, 0
        %s341 = scalar_select %p340, %s339, 0
        %s342 = smul.u32 2, %s341
        %p343 = scmp.lt.s32.totalorder %s34, 1
        %s344 = scalar_select %p343, %s34, 1
        %p345 = scmp.lt.s32.totalorder %s342, 1
        %s346 = scalar_select %p345, %s342, 1
        %s347 = smul.addr %s344, 2
        %s348 = sadd.s32 %s346, %s347
        %s349 = scalar_lea.vmem %s0, %s348
        %p350 = pneg %p77
        %p351 = pneg %p74
        %s352 = sand.u32 %s98, 1
        %s353 = scalar_lea.sflag [#allocation3], %s352
        %s354 = sand.u32 %s98, 1
        %s355 = smul.addr %s354, 8
        %s356 = scalar_lea.vmem [#allocation2], %s355
        %p357 = pneg %p111
        %p358 = pneg %p108
        %s359 = sand.u32 %s132, 1
        %s360 = scalar_lea.sflag [#allocation6], %s359
        %s361 = sand.u32 %s132, 1
        %s362 = smul.addr %s361, 8
        %s363 = scalar_lea.vmem [#allocation5], %s362
        %p364 = pneg %p145
        %p365 = pneg %p142
        %p366 = pneg %p173
        %p367 = pneg %p170
        %s368 = sand.u32 %s160, 1
        %s369 = scalar_lea.sflag [#allocation4], %s368
        %s370 = sand.u32 %s160, 1
        %s371 = smul.addr %s370, 4
        %s372 = scalar_lea.vmem [#allocation7], %s371
        %p373 = pneg %p201
        %p374 = pneg %p198
        %s375 = sand.u32 %s188, 1
        %s376 = scalar_lea.sflag [#allocation9], %s375
        %s377 = sand.u32 %s188, 1
        %s378 = smul.addr %s377, 4
        %s379 = scalar_lea.vmem [#allocation8], %s378
        %p380 = pneg %p229
        %p381 = pneg %p226
        %p382 = scmp.lt.s32.totalorder %s34, 1
        %s383 = scalar_select %p382, %s34, 1
        %p384 = scmp.lt.s32.totalorder %s35, 0
        %s385 = scalar_select %p384, %s35, 0
        %s386 = sadd.s32 %s385, %s383
        %s387 = smul.addr %s386, 4
        %s388 = scalar_lea.vmem %s5, %s387
        %s389 = sadd.s32 %s35, %s36
        %p390 = scmp.lt.s32.totalorder %s389, 0
        %s391 = scalar_select %p390, %s389, 0
        %s392 = smul.u32 2, %s391
        %p393 = scmp.lt.s32.totalorder %s34, 1
        %s394 = scalar_select %p393, %s34, 1
        %p395 = scmp.lt.s32.totalorder %s392, 1
        %s396 = scalar_select %p395, %s392, 1
        %s397 = smul.addr %s394, 2
        %s398 = sadd.s32 %s396, %s397
        %s399 = scalar_lea.vmem %s0, %s398
        %s400 = sadd.s32 %s35, %s36
        %p401 = scmp.lt.s32.totalorder %s400, 0
        %s402 = scalar_select %p401, %s400, 0
        %s403 = smul.u32 2, %s402
        %s404 = sadd.s32 %s35, %s36
        %p405 = scmp.lt.s32.totalorder %s404, 0
        %s406 = scalar_select %p405, %s404, 0
        %s407 = smul.u32 2, %s406
        %s408 = sadd.s32 %s35, %s36
        %p409 = scmp.lt.s32.totalorder %s408, 0
        %s410 = scalar_select %p409, %s408, 0
        %s411 = smul.u32 2, %s410
        %p412 = scmp.lt.s32.totalorder %s34, 1
        %s413 = scalar_select %p412, %s34, 1
        %p414 = scmp.lt.s32.totalorder %s35, 0
        %s415 = scalar_select %p414, %s35, 0
        %s416 = sadd.s32 %s415, %s413
        %s417 = smul.addr %s416, 4
        %s418 = scalar_lea.vmem %s5, %s417
        %p419 = scmp.eq.s32.totalorder %s36, 0
        // Predicated region
        $region41: #{tpu_custom_call.1} parent=31 // pred_check
          %p420 = pneg %p419
        $region42: #{tpu_custom_call.1} parent=31 // pred_check_branch
          %422 = sbr.rel (%p420) target = $region44
        $region43: #{tpu_custom_call.1} parent=31 // pred_region
          %vm423 = vcmask 27648
          %424 = vst.msk [vmem:[%s372] sm:$0xf] %vm423, 0.0
          %425 = vst.msk [vmem:[%s379] sm:$0xf] %vm423, 0.0
          %vm426 = vcmask 3072
          %427 = vst.msk [vmem:[%s418] sm:$0xf] %vm426, 0.0
        $region44: #{tpu_custom_call.1} parent=31 // pred_fallthru
          _
        %v428 = vlaneseq
        %v429 = vshrl.u32 %v428, 7
        %v430 = vlaneseq
        %v431 = vand.u32 %v430, 127
        %v432 = vadd.s32 %v431, 128
        %s433 = sadd.s32 %s35, %s36
        %s434 = smul.u32 %s433, 256
        %s435 = sadd.s32 %s434, 0
        %v436 = vstv %s435
        %v437 = vadd.s32 %v436, %v431
        %v438 = vadd.s32 %v436, %v432
        %vm439 = vcmp.lt.s32.totalorder %v437, 256
        %vm440 = vcmp.lt.s32.totalorder %v438, 256
        %v441 = vld [vmem:[%s399] sm:$0x3]
        %v442 = vunpack.c.0.s8 %v441
        %v443 = vlaneseq
        %v444 = vshrl.u32 %v443, 7
        %v445 = vsub.s32 0, %v444
        %v446 = vrot.slane %v442, %v445
        %v447 = vlaneseq
        %v448 = vshrl.u32 %v447, 7
        %v449 = vsub.s32 4, %v448
        %v450 = vrot.slane %v442, %v449
        %v451 = vlaneseq
        %v452 = vshrl.u32 %v451, 7
        %v453 = vsub.s32 0, %v452
        %v454 = vrot.slane %v446, %v453
        %v455 = vlaneseq
        %v456 = vshrl.u32 %v455, 7
        %v457 = vsub.s32 0, %v456
        %v458 = vrot.slane %v450, %v457
        %vm459 = vcmp.eq.s32.totalorder %v454, %v429
        %vm460 = vcmp.eq.s32.totalorder %v458, %v429
        %v461 = vsel %vm439, 1, 0
        %v462 = vsel %vm440, 1, 0
        %vm463 = vcmp.eq.s32.totalorder %v461, 1
        %vm464 = vcmp.eq.s32.totalorder %v462, 1
        %vm465 = vmand %vm459, %vm463
        %vm466 = vmand %vm460, %vm464
        %v467 = vsel %vm465, 1, 0
        %v468 = vsel %vm466, 1, 0
        %v469 = vcvt.s32.f32 %v467
        %v470 = vcvt.s32.f32 %v468
        %v471 = vld [vmem:[%s325] sm:$0xff]
        %v473 = vcombine.high %v471, %v471
        %v475 = vsel %vm463, %v471, 0.0
        %v476 = vsel %vm464, %v473, 0.0
        %v477 = vld [vmem:[%s334] sm:$0xff]
        %v479 = vcombine.high %v477, %v477
        %v481 = vsel %vm463, %v477, 0.0
        %v482 = vsel %vm464, %v479, 0.0
        %v483 = vld [vmem:[%s372] sm:$0xf]
        %484 = vmatprep.subr.mxu0 %v476
        %485 = vmatpush1.xpose.msra.mxu0 %v475
        %486 = vmatprep.subr.mxu0 0.0
        %487 = vmatpush1.xpose.msra.mxu0 0.0
        %488 = vmatprep.subr.mxu0 0.0
        %489 = vmatpush1.xpose.msra.mxu0 0.0
        %490 = vmatprep.subr.mxu0 0.0
        %491 = vmatpush1.xpose.msra.mxu0 0.0
        %492 = vmatprep.subr.mxu0 0.0
        %493 = vmatpush1.xpose.msra.mxu0 0.0
        %494 = vmatprep.subr.mxu0 0.0
        %495 = vmatpush1.xpose.msra.mxu0 0.0
        %496 = vmatprep.subr.mxu0 0.0
        %497 = vmatpush1.xpose.msra.mxu0 0.0
        %498 = vmatprep.subr.mxu0 0.0
        %499 = vmatpush1.xpose.msra.mxu0 0.0
        %500 = vmatprep.subr.mxu0 0.0
        %501 = vmatpush1.xpose.msra.mxu0 0.0
        %502 = vmatprep.subr.mxu0 0.0
        %503 = vmatpush1.xpose.msra.mxu0 0.0
        %504 = vmatprep.subr.mxu0 0.0
        %505 = vmatpush1.xpose.msra.mxu0 0.0
        %506 = vmatprep.subr.mxu0 0.0
        %507 = vmatpush1.xpose.msra.mxu0 0.0
        %508 = vmatprep.subr.mxu0 0.0
        %509 = vmatpush1.xpose.msra.mxu0 0.0
        %510 = vmatprep.subr.mxu0 0.0
        %511 = vmatpush1.xpose.msra.mxu0 0.0
        %512 = vmatprep.subr.mxu0 0.0
        %513 = vmatpush1.xpose.msra.mxu0 0.0
        %514 = vmatprep.subr.mxu0 0.0
        %515 = vmatpush1.xpose.msra.mxu0 0.0
        %516 = vmatprep.subr.mxu0 0.0
        %517 = vmatpush1.xpose.msra.mxu0 0.0
        %518 = vmatprep.subr.mxu0 0.0
        %519 = vmatpush1.xpose.msra.mxu0 0.0
        %520 = vmatprep.subr.mxu0 0.0
        %521 = vmatpush1.xpose.msra.mxu0 0.0
        %522 = vmatprep.subr.mxu0 0.0
        %523 = vmatpush1.xpose.msra.mxu0 0.0
        %524 = vmatprep.subr.mxu0 0.0
        %525 = vmatpush1.xpose.msra.mxu0 0.0
        %526 = vmatprep.subr.mxu0 0.0
        %527 = vmatpush1.xpose.msra.mxu0 0.0
        %528 = vmatprep.subr.mxu0 0.0
        %529 = vmatpush1.xpose.msra.mxu0 0.0
        %530 = vmatprep.subr.mxu0 0.0
        %531 = vmatpush1.xpose.msra.mxu0 0.0
        %532 = vmatprep.subr.mxu0 0.0
        %533 = vmatpush1.xpose.msra.mxu0 0.0
        %534 = vmatprep.subr.mxu0 0.0
        %535 = vmatpush1.xpose.msra.mxu0 0.0
        %536 = vmatprep.subr.mxu0 0.0
        %537 = vmatpush1.xpose.msra.mxu0 0.0
        %538 = vmatprep.subr.mxu0 0.0
        %539 = vmatpush1.xpose.msra.mxu0 0.0
        %540 = vmatprep.subr.mxu0 0.0
        %541 = vmatpush1.xpose.msra.mxu0 0.0
        %542 = vmatprep.subr.mxu0 0.0
        %543 = vmatpush1.xpose.msra.mxu0 0.0
        %544 = vmatprep.subr.mxu0 0.0
        %545 = vmatpush1.xpose.msra.mxu0 0.0
        %546 = vmatprep.subr.mxu0 0.0
        %547 = vmatpush1.xpose.msra.mxu0 0.0
        %548 = vmatprep.mubr.f32.mxu0 %v470
        %549 = vmatmul.mubr.f32.gmra.mrb[0].mxu0 %v469
        %v550 = vpop.f32.mrb[0].mxu0
        %v551 = vadd.f32 0.0, %v550
        %v552 = vpop.f32.mrb[0].mxu0
        %553 = vdwg.mxu0
        %v554 = vadd.f32 %v483, %v551
        %vm555 = vcmask 27648
        %556 = vst.msk [vmem:[%s372] sm:$0xf] %vm555, %v554
        %v557 = vld [vmem:[%s379] sm:$0xf]
        %558 = vmatprep.subr.mxu0 %v482
        %559 = vmatpush1.xpose.msra.mxu0 %v481
        %560 = vmatprep.subr.mxu0 0.0
        %561 = vmatpush1.xpose.msra.mxu0 0.0
        %562 = vmatprep.subr.mxu0 0.0
        %563 = vmatpush1.xpose.msra.mxu0 0.0
        %564 = vmatprep.subr.mxu0 0.0
        %565 = vmatpush1.xpose.msra.mxu0 0.0
        %566 = vmatprep.subr.mxu0 0.0
        %567 = vmatpush1.xpose.msra.mxu0 0.0
        %568 = vmatprep.subr.mxu0 0.0
        %569 = vmatpush1.xpose.msra.mxu0 0.0
        %570 = vmatprep.subr.mxu0 0.0
        %571 = vmatpush1.xpose.msra.mxu0 0.0
        %572 = vmatprep.subr.mxu0 0.0
        %573 = vmatpush1.xpose.msra.mxu0 0.0
        %574 = vmatprep.subr.mxu0 0.0
        %575 = vmatpush1.xpose.msra.mxu0 0.0
        %576 = vmatprep.subr.mxu0 0.0
        %577 = vmatpush1.xpose.msra.mxu0 0.0
        %578 = vmatprep.subr.mxu0 0.0
        %579 = vmatpush1.xpose.msra.mxu0 0.0
        %580 = vmatprep.subr.mxu0 0.0
        %581 = vmatpush1.xpose.msra.mxu0 0.0
        %582 = vmatprep.subr.mxu0 0.0
        %583 = vmatpush1.xpose.msra.mxu0 0.0
        %584 = vmatprep.subr.mxu0 0.0
        %585 = vmatpush1.xpose.msra.mxu0 0.0
        %586 = vmatprep.subr.mxu0 0.0
        %587 = vmatpush1.xpose.msra.mxu0 0.0
        %588 = vmatprep.subr.mxu0 0.0
        %589 = vmatpush1.xpose.msra.mxu0 0.0
        %590 = vmatprep.subr.mxu0 0.0
        %591 = vmatpush1.xpose.msra.mxu0 0.0
        %592 = vmatprep.subr.mxu0 0.0
        %593 = vmatpush1.xpose.msra.mxu0 0.0
        %594 = vmatprep.subr.mxu0 0.0
        %595 = vmatpush1.xpose.msra.mxu0 0.0
        %596 = vmatprep.subr.mxu0 0.0
        %597 = vmatpush1.xpose.msra.mxu0 0.0
        %598 = vmatprep.subr.mxu0 0.0
        %599 = vmatpush1.xpose.msra.mxu0 0.0
        %600 = vmatprep.subr.mxu0 0.0
        %601 = vmatpush1.xpose.msra.mxu0 0.0
        %602 = vmatprep.subr.mxu0 0.0
        %603 = vmatpush1.xpose.msra.mxu0 0.0
        %604 = vmatprep.subr.mxu0 0.0
        %605 = vmatpush1.xpose.msra.mxu0 0.0
        %606 = vmatprep.subr.mxu0 0.0
        %607 = vmatpush1.xpose.msra.mxu0 0.0
        %608 = vmatprep.subr.mxu0 0.0
        %609 = vmatpush1.xpose.msra.mxu0 0.0
        %610 = vmatprep.subr.mxu0 0.0
        %611 = vmatpush1.xpose.msra.mxu0 0.0
        %612 = vmatprep.subr.mxu0 0.0
        %613 = vmatpush1.xpose.msra.mxu0 0.0
        %614 = vmatprep.subr.mxu0 0.0
        %615 = vmatpush1.xpose.msra.mxu0 0.0
        %616 = vmatprep.subr.mxu0 0.0
        %617 = vmatpush1.xpose.msra.mxu0 0.0
        %618 = vmatprep.subr.mxu0 0.0
        %619 = vmatpush1.xpose.msra.mxu0 0.0
        %620 = vmatprep.subr.mxu0 0.0
        %621 = vmatpush1.xpose.msra.mxu0 0.0
        %622 = vmatprep.mubr.f32.mxu0 %v470
        %623 = vmatmul.mubr.f32.gmra.mrb[0].mxu0 %v469
        %v624 = vpop.f32.mrb[0].mxu0
        %v625 = vadd.f32 0.0, %v624
        %v626 = vpop.f32.mrb[0].mxu0
        %627 = vdwg.mxu0
        %v628 = vadd.f32 %v557, %v625
        %629 = vst.msk [vmem:[%s379] sm:$0xf] %vm555, %v628
        %v630 = vld [vmem:[%s418] sm:$0xf]
        %vm631 = vcmask 1043456
        %v632 = vsel %vm631, %v469, 0.0
        %v633 = vsel %vm631, %v470, 0.0
        %v634 = vadd.f32 %v632, %v633
        %635 = vadd.xlane.f32.xlu0 %v634
        %v636 = vpop.xlane.xlu0 %635
        %v637 = vadd.f32 %v630, %v636
        %vm638 = vcmask 3072
        %639 = vst.msk [vmem:[%s418] sm:$0xf] %vm638, %v637
        %s640 = sand.u32 %s160, 1
        %s641 = scalar_lea.sflag [#allocation4], %s640
        %s642 = sand.u32 %s160, 1
        %s643 = smul.addr %s642, 4
        %s644 = scalar_lea.vmem [#allocation7], %s643
        %s645 = sand.u32 %s188, 1
        %s646 = scalar_lea.sflag [#allocation9], %s645
        %s647 = sand.u32 %s188, 1
        %s648 = smul.addr %s647, 4
        %s649 = scalar_lea.vmem [#allocation8], %s648
        %p650 = scmp.lt.s32.totalorder %s34, 1
        %s651 = scalar_select %p650, %s34, 1
        %p652 = scmp.lt.s32.totalorder %s35, 0
        %s653 = scalar_select %p652, %s35, 0
        %s654 = sadd.s32 %s653, %s651
        %s655 = smul.addr %s654, 4
        %s656 = scalar_lea.vmem %s5, %s655
        // Predicated region
        $region45: #{tpu_custom_call.1} parent=31 // pred_check
          %p657 = pneg %p170
        $region46: #{tpu_custom_call.1} parent=31 // pred_check_branch
          %659 = sbr.rel (%p657) target = $region48
        $region47: #{tpu_custom_call.1} parent=31 // pred_region
          %s661 = ssub.s32 64, 64
          %662 = vsyncadd %s641, %s661
          %s663 = sadd.s32 %s35, %s34
          %s664 = smul.addr %s663, 64
          %s665 = scalar_lea.hbm %s3, %s664
          %s667 = sshll.u32 %s644, 4
          %s668 = int_to_ptr.vmem [resolvable:$true] %s667
          %670 = dma.vmem_to_hbm [thread:$0]  %s668, 64, %s665, %s641
        $region48: #{tpu_custom_call.1} parent=31 // pred_fallthru
          _
        // Predicated region
        $region49: #{tpu_custom_call.1} parent=31 // pred_check
          %p671 = pneg %p198
        $region50: #{tpu_custom_call.1} parent=31 // pred_check_branch
          %673 = sbr.rel (%p671) target = $region52
        $region51: #{tpu_custom_call.1} parent=31 // pred_region
          %s675 = ssub.s32 64, 64
          %676 = vsyncadd %s646, %s675
          %s677 = sadd.s32 %s35, %s34
          %s678 = smul.addr %s677, 64
          %s679 = scalar_lea.hbm %s4, %s678
          %s681 = sshll.u32 %s649, 4
          %s682 = int_to_ptr.vmem [resolvable:$true] %s681
          %684 = dma.vmem_to_hbm [thread:$0]  %s682, 64, %s679, %s646
        $region52: #{tpu_custom_call.1} parent=31 // pred_fallthru
          _
        // Predicated region
        $region53: #{tpu_custom_call.1} parent=31 // pred_check
          %p685 = pneg %p226
        $region54: #{tpu_custom_call.1} parent=31 // pred_check_branch
          %687 = sbr.rel (%p685) target = $region56
        $region55: #{tpu_custom_call.1} parent=31 // pred_region
          _
        $region56: #{tpu_custom_call.1} parent=31 // pred_fallthru
          _
      $region32: #{tpu_custom_call.1} parent=5 // pred_fallthru
        _
      %p688 = scmp.le.s32.totalorder 2, %s24
      // Predicated region
      $region57: #{tpu_custom_call.1} parent=5 // pred_check
        %p689 = pneg %p688
      $region58: #{tpu_custom_call.1} parent=5 // pred_check_branch
        %691 = sbr.rel (%p689) target = $region60
      $region59: #{tpu_custom_call.1} parent=5 // pred_region
        %s692 = ssub.s32 %s24, 2
        // Predicated region
        $region61: #{tpu_custom_call.1} parent=59 // pred_check
          %p693 = pneg %p176
        $region62: #{tpu_custom_call.1} parent=59 // pred_check_branch
          %695 = sbr.rel (%p693) target = $region64
        $region63: #{tpu_custom_call.1} parent=59 // pred_region
          %s696 = sand.u32 %s161, 1
          %s697 = scalar_lea.sflag [#allocation4], %s696
          %s698 = sand.u32 %s161, 1
          %s699 = smul.addr %s698, 4
          %s700 = scalar_lea.vmem [#allocation7], %s699
          %701 = dma.done %s697, 64
        $region64: #{tpu_custom_call.1} parent=59 // pred_fallthru
          _
        // Predicated region
        $region65: #{tpu_custom_call.1} parent=59 // pred_check
          %p702 = pneg %p204
        $region66: #{tpu_custom_call.1} parent=59 // pred_check_branch
          %704 = sbr.rel (%p702) target = $region68
        $region67: #{tpu_custom_call.1} parent=59 // pred_region
          %s705 = sand.u32 %s189, 1
          %s706 = scalar_lea.sflag [#allocation9], %s705
          %s707 = sand.u32 %s189, 1
          %s708 = smul.addr %s707, 4
          %s709 = scalar_lea.vmem [#allocation8], %s708
          %710 = dma.done %s706, 64
        $region68: #{tpu_custom_call.1} parent=59 // pred_fallthru
          _
        // Predicated region
        $region69: #{tpu_custom_call.1} parent=59 // pred_check
          %p711 = pneg %p232
        $region70: #{tpu_custom_call.1} parent=59 // pred_check_branch
          %713 = sbr.rel (%p711) target = $region72
        $region71: #{tpu_custom_call.1} parent=59 // pred_region
          %p714 = scmp.lt.s32.totalorder %s37, 1
          %s715 = scalar_select %p714, %s37, 1
          %p716 = scmp.lt.s32.totalorder %s38, 0
          %s717 = scalar_select %p716, %s38, 0
          %s718 = sadd.s32 %s717, %s715
          %s719 = smul.addr %s718, 4
          %s720 = scalar_lea.vmem %s5, %s719
        $region72: #{tpu_custom_call.1} parent=59 // pred_fallthru
          _
      $region60: #{tpu_custom_call.1} parent=5 // pred_fallthru
        _
    $region6: #{tpu_custom_call.1} parent=1 // loop_footer
      %s28 = sadd.s32 1, %s24
    $region7: #{tpu_custom_call.1} parent=1 // loop_footer_branch
      %23 = sbr.rel target = $region3
    $region8: #{tpu_custom_call.1} parent=1 // loop_exit
      _
    %721 = vsyncpa [#allocation3], 1
    %s722 = scalar_lea.sflag [#allocation3], 1
    %723 = vsyncpa %s722, 1
    %724 = vsyncpa [#allocation6], 1
    %s725 = scalar_lea.sflag [#allocation6], 1
    %726 = vsyncpa %s725, 1
    %727 = vsyncpa [#allocation4], 1
    %s728 = scalar_lea.sflag [#allocation4], 1
    %729 = vsyncpa %s728, 1
    %730 = vsyncpa [#allocation9], 1
    %s731 = scalar_lea.sflag [#allocation9], 1
    %732 = vsyncpa %s731, 1

</llo_original>
